<compile_context>
chip_gen: v7x
topology: tpu7x:2x2x1
jax: 0.10.0
libtpu: 0.0.40
codegen_flags: <defaults>
</compile_context>

<pallas_src>
import math

import jax
import jax.numpy as jnp
from jax import lax
from jax.experimental import pallas as pl
from jax.experimental.pallas import tpu as pltpu

GN_EPS = 1e-5  # PyTorch GroupNorm default

# Conservative per-step working-set budget + scoped-VMEM limit.  v7x has only
# 64 MiB physical VMEM (32 MiB default scoped); v5e/v6e have 128 MiB.  Sizing
# the batch tile against ~12 MiB of live per-step state under a 32 MiB scoped
# limit keeps one tiling codebase safe on all three generations.
_VMEM_BUDGET_BYTES = 12 * 1024 * 1024
_VMEM_LIMIT_BYTES = 32 * 1024 * 1024


def _conv_to_matrix(w, W):
    """Fold a 3-tap 'same'-padded Conv1d weight (C_out, C_in, 3) into a dense
    (C_in*W, C_out*W) matrix M so that out_row = x_row @ M, with the zero
    padding at the spatial edges baked in."""
    C_out, C_in, _ = w.shape
    wi = jnp.arange(W)[:, None]          # input spatial position
    wo = jnp.arange(W)[None, :]          # output spatial position
    k = wi - wo + 1                      # tap index; valid taps are 0..2
    valid = ((k >= 0) & (k <= 2)).astype(w.dtype)
    taps = w[:, :, jnp.clip(k, 0, 2)] * valid[None, None]   # (C_out, C_in, W, W)
    return jnp.transpose(taps, (1, 2, 0, 3)).reshape(C_in * W, C_out * W)


def _pick_tiling(B, K_in, K_out):
    """Pick the batch tile TB (sublane axis), grid size and padded batch."""
    # Rough f32 bytes of live per-sample state per grid step: double-buffered
    # x/out blocks + matmul operands/results + GroupNorm temporaries.
    per_sample = 4 * (8 * K_in + 10 * K_out)
    tb_cap = max(8, (_VMEM_BUDGET_BYTES // per_sample) // 8 * 8)
    n_tiles = max(1, -(-B // tb_cap))
    if n_tiles == 1 and B >= 16:
        n_tiles = 2                      # v7x megacore: keep both TCs busy
    per_tile = -(-B // n_tiles)
    tb = -(-per_tile // 8) * 8           # sublane multiple of 8
    return tb, n_tiles, n_tiles * tb


def _make_cgnl_kernel(K_out, use_scale, scale, inv_n, mxu_dtype):
    def kernel(x_ref, wtpg_ref, wz_ref, gamma_ref, beta_ref, o_ref):
        x = x_ref[...]                                         # (TB, K_in) f32
        xm = x.astype(mxu_dtype)

        # Fused theta/phi/g conv: one MXU matmul against the packed Toeplitz.
        tpg = jnp.dot(xm, wtpg_ref[...],
                      preferred_element_type=jnp.float32)      # (TB, 3*K_out)
        t = tpg[:, 0:K_out]
        p = tpg[:, K_out:2 * K_out]
        g = tpg[:, 2 * K_out:3 * K_out]

        # Dot-product attention: per-sample scalar = cross-lane reduction.
        att = jnp.sum(p * g, axis=-1, keepdims=True)           # (TB, 1)
        if use_scale:
            att = att * scale
        xk = att * t                                            # (TB, K_out)

        # z conv (second fused matmul).
        y = jnp.dot(xk.astype(mxu_dtype), wz_ref[...],
                    preferred_element_type=jnp.float32)         # (TB, K_in)

        # GroupNorm(num_groups=1): per-sample stats over the lane axis in one
        # pass via E[y^2] - mean^2, clamped against f32 cancellation.
        mean = jnp.sum(y, axis=-1, keepdims=True) * inv_n       # (TB, 1)
        ey2 = jnp.sum(y * y, axis=-1, keepdims=True) * inv_n
        var = jnp.maximum(ey2 - mean * mean, 0.0)
        yhat = (y - mean) * lax.rsqrt(var + GN_EPS)

        # Per-channel affine + residual (gamma/beta pre-expanded to (1, K_in)).
        o_ref[...] = gamma_ref[...] * yhat + beta_ref[...] + x

    return kernel


def spatial_cgnl(x, wt, wp, wg, wz, gamma, beta, *, use_scale=False, groups=1,
                 mxu_dtype=jnp.bfloat16):
    """x: (B, C_in, W) f32.  wt/wp/wg: (C_out, C_in, 3).  wz: (C_in, C_out, 3).
    gamma/beta: (C_in,).  Returns (B, C_in, W) f32.

    mxu_dtype: dtype of MXU-facing operands (bf16 recommended on v6e/v7x;
    pass jnp.float32 for bit-accurate checks).  Accumulation is always f32."""
    if groups != 1:
        # TODO(synk): grouped channel split for the dot-product kernel + grouped z conv.
        raise NotImplementedError("groups > 1 not implemented in the Pallas kernel")

    B, C_in, W = x.shape
    C_out = wt.shape[0]
    K_in, K_out = C_in * W, C_out * W

    TB, n_tiles, Bp = _pick_tiling(B, K_in, K_out)

    # Lane-dense (B, C*W) layout: a pure row-major reshape (no repack traffic).
    # TODO(synk): when chaining SpatialCGNL blocks, keep activations in this
    # (B, C*W) layout across calls instead of reshaping per call.
    x_flat = x.astype(jnp.float32).reshape(B, K_in)
    if Bp != B:
        x_flat = jnp.pad(x_flat, ((0, Bp - B), (0, 0)))

    # Fold the three 'same' convs (+ their zero padding) into one Toeplitz
    # matmul weight, and the z-conv into a second one.
    M_tpg = jnp.concatenate([_conv_to_matrix(wt.astype(jnp.float32), W),
                             _conv_to_matrix(wp.astype(jnp.float32), W),
                             _conv_to_matrix(wg.astype(jnp.float32), W)],
                            axis=1).astype(mxu_dtype)                 # (K_in, 3*K_out)
    M_z = _conv_to_matrix(wz.astype(jnp.float32), W).astype(mxu_dtype)  # (K_out, K_in)

    gamma_row = jnp.repeat(gamma.astype(jnp.float32), W).reshape(1, K_in)
    beta_row = jnp.repeat(beta.astype(jnp.float32), W).reshape(1, K_in)

    kernel = _make_cgnl_kernel(K_out, use_scale, 1.0 / math.sqrt(C_out * W),
                               1.0 / K_in, mxu_dtype)

    act_spec = pl.BlockSpec((TB, K_in), lambda i: (i, 0))

    def const_spec(shape):
        # Constant index_map -> fetched once, not re-DMA'd per grid step.
        return pl.BlockSpec(shape, lambda i: (0, 0))

    flops = int(2 * Bp * K_in * 3 * K_out + 2 * Bp * K_out * K_in
                + 12 * Bp * max(K_in, K_out))
    bytes_accessed = int(4 * (2 * Bp * K_in + 2 * K_in)
                         + M_tpg.size * M_tpg.dtype.itemsize
                         + M_z.size * M_z.dtype.itemsize)

    out_flat = pl.pallas_call(
        kernel,
        out_shape=jax.ShapeDtypeStruct((Bp, K_in), jnp.float32),
        grid=(n_tiles,),
        in_specs=[act_spec,
                  const_spec((K_in, 3 * K_out)),
                  const_spec((K_out, K_in)),
                  const_spec((1, K_in)),
                  const_spec((1, K_in))],
        out_specs=act_spec,
        compiler_params=pltpu.CompilerParams(
            dimension_semantics=("parallel",),
            vmem_limit_bytes=_VMEM_LIMIT_BYTES),
        cost_estimate=pl.CostEstimate(flops=flops, transcendentals=int(Bp),
                                      bytes_accessed=bytes_accessed),
    )(x_flat, M_tpg, M_z, gamma_row, beta_row)

    return out_flat[:B].reshape(B, C_in, W)


def _reference(x, wt, wp, wg, wz, gamma, beta, use_scale=False):
    """Pure-JAX reference mirroring the PyTorch forward (groups=1)."""
    def conv(a, w):
        return lax.conv_general_dilated(a, w, (1,), [(1, 1)],
                                        dimension_numbers=("NCH", "OIH", "NCH"))
    t = conv(x, wt); p = conv(x, wp); g = conv(x, wg)
    b, c, w = t.shape
    att = jnp.sum(p.reshape(b, -1) * g.reshape(b, -1), axis=1)
    if use_scale:
        att = att / jnp.sqrt(float(c * w))
    xk = att[:, None, None] * t
    y = conv(xk, wz)
    mean = y.reshape(b, -1).mean(axis=1)[:, None, None]
    var = ((y - mean) ** 2).reshape(b, -1).mean(axis=1)[:, None, None]
    yhat = (y - mean) / jnp.sqrt(var + GN_EPS)
    return gamma[None, :, None] * yhat + beta[None, :, None] + x


if __name__ == "__main__":
    # Small shapes consistent with the module: Conv1d forward => x is (B, C, W).
    B, C_IN, C_OUT, W = 2, 8, 8, 16   # inplanes=8, planes=8, width=16

    key = jax.random.PRNGKey(0)
    kx, kt, kp, kg, kz, kgm, kbt, kx2 = jax.random.split(key, 8)

    x = jax.random.normal(kx, (B, C_IN, W), dtype=jnp.float32)
    wt = 0.1 * jax.random.normal(kt, (C_OUT, C_IN, 3), dtype=jnp.float32)
    wp = 0.1 * jax.random.normal(kp, (C_OUT, C_IN, 3), dtype=jnp.float32)
    wg = 0.1 * jax.random.normal(kg, (C_OUT, C_IN, 3), dtype=jnp.float32)
    wz = 0.1 * jax.random.normal(kz, (C_IN, C_OUT, 3), dtype=jnp.float32)
    gamma = 1.0 + 0.1 * jax.random.normal(kgm, (C_IN,), dtype=jnp.float32)
    beta = 0.1 * jax.random.normal(kbt, (C_IN,), dtype=jnp.float32)

    # 1) Strict check of the kernel math (f32 MXU operands), no attention scale.
    out = jax.block_until_ready(
        spatial_cgnl(x, wt, wp, wg, wz, gamma, beta,
                     use_scale=False, mxu_dtype=jnp.float32))
    ref = _reference(x, wt, wp, wg, wz, gamma, beta, use_scale=False)
    err = float(jnp.max(jnp.abs(out - ref)))
    assert err < 1e-3, f"f32 mismatch (use_scale=False): max abs err = {err}"

    # 2) Strict check with the attention scale enabled.
    out_s = jax.block_until_ready(
        spatial_cgnl(x, wt, wp, wg, wz, gamma, beta,
                     use_scale=True, mxu_dtype=jnp.float32))
    ref_s = _reference(x, wt, wp, wg, wz, gamma, beta, use_scale=True)
    err_s = float(jnp.max(jnp.abs(out_s - ref_s)))
    assert err_s < 1e-3, f"f32 mismatch (use_scale=True): max abs err = {err_s}"

    # 3) bf16 MXU fast path (production setting on v6e/v7x) on a multi-tile
    #    grid with batch padding; loose tolerance for the bf16 operand cast.
    B2 = 40
    x2 = jax.random.normal(kx2, (B2, C_IN, W), dtype=jnp.float32)
    out_b = jax.block_until_ready(
        spatial_cgnl(x2, wt, wp, wg, wz, gamma, beta,
                     use_scale=False, mxu_dtype=jnp.bfloat16))
    ref_b = _reference(x2, wt, wp, wg, wz, gamma, beta, use_scale=False)
    err_b = float(jnp.max(jnp.abs(out_b - ref_b)))
    assert err_b < 1e-1, f"bf16 mismatch: max abs err = {err_b}"

    print("KERNEL_OK")
</pallas_src>

<mosaic_0001>
module attributes {stable_mosaic.version = 11 : i64} {
  func.func @kernel(%arg0: i32, %arg1: memref<8x128xf32, #tpu.memory_space<vmem>>, %arg2: memref<128x384xf32, #tpu.memory_space<vmem>>, %arg3: memref<128x128xf32, #tpu.memory_space<vmem>>, %arg4: memref<1x128xf32, #tpu.memory_space<vmem>>, %arg5: memref<1x128xf32, #tpu.memory_space<vmem>>, %arg6: memref<8x128xf32, #tpu.memory_space<vmem>>) attributes {dimension_semantics = [#tpu.dimension_semantics<parallel>], iteration_bounds = array<i64: 1>, scalar_prefetch = 0 : i64, scratch_operands = 0 : i64, tpu.core_type = #tpu.core_type<tc>, window_params = [{transform_indices = @transform_0, window_bounds = array<i64: 8, 128>}, {pipeline_mode = #tpu.pipeline_mode<synchronous>, transform_indices = @transform_1, window_bounds = array<i64: 128, 384>}, {pipeline_mode = #tpu.pipeline_mode<synchronous>, transform_indices = @transform_2, window_bounds = array<i64: 128, 128>}, {pipeline_mode = #tpu.pipeline_mode<synchronous>, transform_indices = @transform_3, window_bounds = array<i64: 1, 128>}, {pipeline_mode = #tpu.pipeline_mode<synchronous>, transform_indices = @transform_4, window_bounds = array<i64: 1, 128>}, {transform_indices = @transform_5, window_bounds = array<i64: 8, 128>}]} {
    %c0 = arith.constant 0 : index
    %c0_0 = arith.constant 0 : index
    %0 = vector.load %arg1[%c0, %c0_0] : memref<8x128xf32, #tpu.memory_space<vmem>>, vector<8x128xf32>
    %c0_1 = arith.constant 0 : index
    %c0_2 = arith.constant 0 : index
    %1 = vector.load %arg2[%c0_1, %c0_2] : memref<128x384xf32, #tpu.memory_space<vmem>>, vector<128x384xf32>
    %cst = arith.constant dense<0.000000e+00> : vector<8x384xf32>
    %2 = tpu.matmul %0, %1, %cst {dimension_numbers = #tpu.dot_dimension_numbers<[1], [0], [0], [1], [0, 0, 1, 1], [], []>} : vector<8x128xf32>, vector<128x384xf32>, vector<8x384xf32> -> vector<8x384xf32>
    %3 = vector.extract_strided_slice %2 {offsets = [0, 0], sizes = [8, 128], strides = [1, 1]} : vector<8x384xf32> to vector<8x128xf32>
    %4 = vector.extract_strided_slice %2 {offsets = [0, 128], sizes = [8, 128], strides = [1, 1]} : vector<8x384xf32> to vector<8x128xf32>
    %5 = vector.extract_strided_slice %2 {offsets = [0, 256], sizes = [8, 128], strides = [1, 1]} : vector<8x384xf32> to vector<8x128xf32>
    %6 = arith.mulf %4, %5 : vector<8x128xf32>
    %cst_3 = arith.constant dense<0.000000e+00> : vector<8xf32>
    %7 = vector.multi_reduction <add>, %6, %cst_3 [1] : vector<8x128xf32> to vector<8xf32>
    %8 = vector.shape_cast %7 : vector<8xf32> to vector<8x1xf32>
    %9 = vector.broadcast %8 : vector<8x1xf32> to vector<8x128xf32>
    %10 = arith.mulf %9, %3 : vector<8x128xf32>
    %c0_4 = arith.constant 0 : index
    %c0_5 = arith.constant 0 : index
    %11 = vector.load %arg3[%c0_4, %c0_5] : memref<128x128xf32, #tpu.memory_space<vmem>>, vector<128x128xf32>
    %cst_6 = arith.constant dense<0.000000e+00> : vector<8x128xf32>
    %12 = tpu.matmul %10, %11, %cst_6 {dimension_numbers = #tpu.dot_dimension_numbers<[1], [0], [0], [1], [0, 0, 1, 1], [], []>} : vector<8x128xf32>, vector<128x128xf32>, vector<8x128xf32> -> vector<8x128xf32>
    %cst_7 = arith.constant dense<0.000000e+00> : vector<8xf32>
    %13 = vector.multi_reduction <add>, %12, %cst_7 [1] : vector<8x128xf32> to vector<8xf32>
    %14 = vector.shape_cast %13 : vector<8xf32> to vector<8x1xf32>
    %cst_8 = arith.constant 7.812500e-03 : f32
    %15 = vector.broadcast %cst_8 : f32 to vector<8x1xf32>
    %16 = arith.mulf %14, %15 : vector<8x1xf32>
    %17 = arith.mulf %12, %12 : vector<8x128xf32>
    %cst_9 = arith.constant dense<0.000000e+00> : vector<8xf32>
    %18 = vector.multi_reduction <add>, %17, %cst_9 [1] : vector<8x128xf32> to vector<8xf32>
    %19 = vector.shape_cast %18 : vector<8xf32> to vector<8x1xf32>
    %cst_10 = arith.constant 7.812500e-03 : f32
    %20 = vector.broadcast %cst_10 : f32 to vector<8x1xf32>
    %21 = arith.mulf %19, %20 : vector<8x1xf32>
    %22 = arith.mulf %16, %16 : vector<8x1xf32>
    %23 = arith.subf %21, %22 : vector<8x1xf32>
    %cst_11 = arith.constant 0.000000e+00 : f32
    %24 = vector.broadcast %cst_11 : f32 to vector<8x1xf32>
    %25 = arith.maximumf %23, %24 : vector<8x1xf32>
    %26 = vector.broadcast %16 : vector<8x1xf32> to vector<8x128xf32>
    %27 = arith.subf %12, %26 : vector<8x128xf32>
    %cst_12 = arith.constant 9.99999974E-6 : f32
    %28 = vector.broadcast %cst_12 : f32 to vector<8x1xf32>
    %29 = arith.addf %25, %28 : vector<8x1xf32>
    %30 = math.rsqrt %29 : vector<8x1xf32>
    %31 = vector.broadcast %30 : vector<8x1xf32> to vector<8x128xf32>
    %32 = arith.mulf %27, %31 : vector<8x128xf32>
    %c0_13 = arith.constant 0 : index
    %c0_14 = arith.constant 0 : index
    %33 = vector.load %arg4[%c0_13, %c0_14] : memref<1x128xf32, #tpu.memory_space<vmem>>, vector<1x128xf32>
    %34 = vector.broadcast %33 : vector<1x128xf32> to vector<8x128xf32>
    %35 = arith.mulf %34, %32 : vector<8x128xf32>
    %c0_15 = arith.constant 0 : index
    %c0_16 = arith.constant 0 : index
    %36 = vector.load %arg5[%c0_15, %c0_16] : memref<1x128xf32, #tpu.memory_space<vmem>>, vector<1x128xf32>
    %37 = vector.broadcast %36 : vector<1x128xf32> to vector<8x128xf32>
    %38 = arith.addf %35, %37 : vector<8x128xf32>
    %39 = arith.addf %38, %0 : vector<8x128xf32>
    %c0_17 = arith.constant 0 : index
    %c0_18 = arith.constant 0 : index
    %40 = vector.load %arg6[%c0_17, %c0_18] : memref<8x128xf32, #tpu.memory_space<vmem>>, vector<8x128xf32>
    tpu.vector_store %arg6[%c0_17, %c0_18], %39 {strides = array<i32>} : memref<8x128xf32, #tpu.memory_space<vmem>>, vector<8x128xf32>,
    return
  }
  func.func @transform_0(%arg0: i32) -> (i32, i32) {
    %c0_i32 = arith.constant 0 : i32
    %c0_i32_0 = arith.constant 0 : i32
    return %arg0, %c0_i32 : i32, i32
  }
  func.func @transform_1(%arg0: i32) -> (i32, i32) {
    %c0_i32 = arith.constant 0 : i32
    %c0_i32_0 = arith.constant 0 : i32
    %c0_i32_1 = arith.constant 0 : i32
    return %c0_i32, %c0_i32_0 : i32, i32
  }
  func.func @transform_2(%arg0: i32) -> (i32, i32) {
    %c0_i32 = arith.constant 0 : i32
    %c0_i32_0 = arith.constant 0 : i32
    %c0_i32_1 = arith.constant 0 : i32
    return %c0_i32, %c0_i32_0 : i32, i32
  }
  func.func @transform_3(%arg0: i32) -> (i32, i32) {
    %c0_i32 = arith.constant 0 : i32
    %c0_i32_0 = arith.constant 0 : i32
    %c0_i32_1 = arith.constant 0 : i32
    return %c0_i32, %c0_i32_0 : i32, i32
  }
  func.func @transform_4(%arg0: i32) -> (i32, i32) {
    %c0_i32 = arith.constant 0 : i32
    %c0_i32_0 = arith.constant 0 : i32
    %c0_i32_1 = arith.constant 0 : i32
    return %c0_i32, %c0_i32_0 : i32, i32
  }
  func.func @transform_5(%arg0: i32) -> (i32, i32) {
    %c0_i32 = arith.constant 0 : i32
    %c0_i32_0 = arith.constant 0 : i32
    return %arg0, %c0_i32 : i32, i32
  }
}

</mosaic_0001>

<llo_original>
// kernel: tpu_custom_call.1
$region0: #{tpu_custom_call.1}
  #allocation0 [shape = 'u32[]', space=smem, size = 0x4, offset = 0x4, fixed_abs, tag = 'smem constant byte address 0x4 - core index']
  #allocation1 [shape = 'u32[144,128]{1,0:T(1,128)}', space=vmem, size = 0x12000, scoped, tag = 'internal scratch']
  %s0 = inlined_call_operand.hbm [shape: f32[8,128], index: 0, kind: input, shape index: {}]
  %s1 = inlined_call_operand.hbm [shape: f32[128,384], index: 1, kind: input, shape index: {}]
  %s2 = inlined_call_operand.hbm [shape: f32[128,128], index: 2, kind: input, shape index: {}]
  %s3 = inlined_call_operand.vmem [shape: f32[1,128], index: 3, kind: input, shape index: {}]
  %s4 = inlined_call_operand.vmem [shape: f32[1,128], index: 4, kind: input, shape index: {}]
  %s5 = inlined_call_operand.hbm [shape: f32[8,128], index: 5, kind: output, shape index: {}]
  %s6 = sld [smem:[#allocation0]]
  $region42: #{tpu_custom_call.1} parent=0
    _
  %s8 = ssub.s32 1, %s6
  %s9 = scalar_select 0, %s8, %s6
  $region1: #{tpu_custom_call.1} parent=0
    #allocation2 [shape = 'u8[4096]{0}', space=vmem, size = 0x1000, scoped, tag = 'input window, operand 0, single buffered']
    #allocation3 [shape = 's32[1]{0}', space=sflag, size = 0x4, scoped, tag = 'scoped memory for tpu_custom_call.1']
    #allocation4 [shape = 's32[1]{0}', space=sflag, size = 0x4, scoped, tag = 'scoped memory for tpu_custom_call.1']
    #allocation5 [shape = 'u8[196608]{0}', space=vmem, size = 0x30000, scoped, tag = 'input window, operand 1, single buffered']
    #allocation6 [shape = 's32[1]{0}', space=sflag, size = 0x4, scoped, tag = 'scoped memory for tpu_custom_call.1']
    #allocation7 [shape = 'u8[65536]{0}', space=vmem, size = 0x10000, scoped, tag = 'input window, operand 2, single buffered']
    #allocation8 [shape = 'u8[4096]{0}', space=vmem, size = 0x1000, scoped, tag = 'output window, operand 0, single buffered']
    %10 = vsyncpa [#allocation3], 0
    %11 = vsyncpa [#allocation6], 0
    %12 = vsyncpa [#allocation4], 0
    // Predicated region
    $region2: #{tpu_custom_call.1} parent=1 // pred_check
      _
    $region3: #{tpu_custom_call.1} parent=1 // pred_check_branch
      %14 = sbr.rel (0) target = $region5
    $region4: #{tpu_custom_call.1} parent=1 // pred_region
      %s16 = ssub.s32 128, 128
      %17 = vsyncadd [#allocation3], %s16
      %s19 = sshll.u32 [#allocation2], 4
      %s20 = int_to_ptr.vmem [resolvable:$true] %s19
      %22 = dma.hbm_to_vmem [thread:$0]  %s0, 128, %s20, [#allocation3]
    $region5: #{tpu_custom_call.1} parent=1 // pred_fallthru
      _
    // Predicated region
    $region6: #{tpu_custom_call.1} parent=1 // pred_check
      _
    $region7: #{tpu_custom_call.1} parent=1 // pred_check_branch
      %24 = sbr.rel (0) target = $region9
    $region8: #{tpu_custom_call.1} parent=1 // pred_region
      %s26 = ssub.s32 6144, 6144
      %27 = vsyncadd [#allocation6], %s26
      %s28 = sshll.u32 [#allocation5], 4
      %s29 = int_to_ptr.vmem [resolvable:$true] %s28
      %34 = dma.hbm_to_vmem [thread:$0]  %s1, 6144, %s29, [#allocation6], 384, 384, 24
    $region9: #{tpu_custom_call.1} parent=1 // pred_fallthru
      _
    // Predicated region
    $region10: #{tpu_custom_call.1} parent=1 // pred_check
      _
    $region11: #{tpu_custom_call.1} parent=1 // pred_check_branch
      %36 = sbr.rel (0) target = $region13
    $region12: #{tpu_custom_call.1} parent=1 // pred_region
      %s38 = ssub.s32 2048, 2048
      %39 = vsyncadd [#allocation6], %s38
      %s40 = sshll.u32 [#allocation7], 4
      %s41 = int_to_ptr.vmem [resolvable:$true] %s40
      %46 = dma.hbm_to_vmem [thread:$0]  %s2, 2048, %s41, [#allocation6], 128, 128, 8
    $region13: #{tpu_custom_call.1} parent=1 // pred_fallthru
      _
    // Predicated region
    $region14: #{tpu_custom_call.1} parent=1 // pred_check
      _
    $region15: #{tpu_custom_call.1} parent=1 // pred_check_branch
      %48 = sbr.rel (0) target = $region17
    $region16: #{tpu_custom_call.1} parent=1 // pred_region
      _
    $region17: #{tpu_custom_call.1} parent=1 // pred_fallthru
      _
    // Predicated region
    $region18: #{tpu_custom_call.1} parent=1 // pred_check
      _
    $region19: #{tpu_custom_call.1} parent=1 // pred_check_branch
      %50 = sbr.rel (0) target = $region21
    $region20: #{tpu_custom_call.1} parent=1 // pred_region
      _
    $region21: #{tpu_custom_call.1} parent=1 // pred_fallthru
      _
    // Predicated region
    $region22: #{tpu_custom_call.1} parent=1 // pred_check
      _
    $region23: #{tpu_custom_call.1} parent=1 // pred_check_branch
      %52 = sbr.rel (0) target = $region25
    $region24: #{tpu_custom_call.1} parent=1 // pred_region
      %53 = dma.done [#allocation3], 128
    $region25: #{tpu_custom_call.1} parent=1 // pred_fallthru
      _
    // Predicated region
    $region26: #{tpu_custom_call.1} parent=1 // pred_check
      _
    $region27: #{tpu_custom_call.1} parent=1 // pred_check_branch
      %55 = sbr.rel (0) target = $region29
    $region28: #{tpu_custom_call.1} parent=1 // pred_region
      %56 = dma.done [#allocation6], 6144
    $region29: #{tpu_custom_call.1} parent=1 // pred_fallthru
      _
    // Predicated region
    $region30: #{tpu_custom_call.1} parent=1 // pred_check
      _
    $region31: #{tpu_custom_call.1} parent=1 // pred_check_branch
      %58 = sbr.rel (0) target = $region33
    $region32: #{tpu_custom_call.1} parent=1 // pred_region
      %59 = dma.done [#allocation6], 2048
    $region33: #{tpu_custom_call.1} parent=1 // pred_fallthru
      _
    %v60 = vld [vmem:[#allocation2] sm:$0xff]
    %v61 = vld [vmem:[#allocation5] sm:$0xff]
    %v62 = vld [vmem:[#allocation5 + $0x8] sm:$0xff]
    %v63 = vld [vmem:[#allocation5 + $0x10] sm:$0xff]
    %v64 = vld [vmem:[#allocation5 + $0x18] sm:$0xff]
    %v65 = vld [vmem:[#allocation5 + $0x20] sm:$0xff]
    %v66 = vld [vmem:[#allocation5 + $0x28] sm:$0xff]
    %v67 = vld [vmem:[#allocation5 + $0x30] sm:$0xff]
    %v68 = vld [vmem:[#allocation5 + $0x38] sm:$0xff]
    %v69 = vld [vmem:[#allocation5 + $0x40] sm:$0xff]
    %v70 = vld [vmem:[#allocation5 + $0x48] sm:$0xff]
    %v71 = vld [vmem:[#allocation5 + $0x50] sm:$0xff]
    %v72 = vld [vmem:[#allocation5 + $0x58] sm:$0xff]
    %v73 = vld [vmem:[#allocation5 + $0x60] sm:$0xff]
    %v74 = vld [vmem:[#allocation5 + $0x68] sm:$0xff]
    %v75 = vld [vmem:[#allocation5 + $0x70] sm:$0xff]
    %v76 = vld [vmem:[#allocation5 + $0x78] sm:$0xff]
    %v77 = vld [vmem:[#allocation5 + $0x80] sm:$0xff]
    %v78 = vld [vmem:[#allocation5 + $0x88] sm:$0xff]
    %v79 = vld [vmem:[#allocation5 + $0x90] sm:$0xff]
    %v80 = vld [vmem:[#allocation5 + $0x98] sm:$0xff]
    %v81 = vld [vmem:[#allocation5 + $0xa0] sm:$0xff]
    %v82 = vld [vmem:[#allocation5 + $0xa8] sm:$0xff]
    %v83 = vld [vmem:[#allocation5 + $0xb0] sm:$0xff]
    %v84 = vld [vmem:[#allocation5 + $0xb8] sm:$0xff]
    %v85 = vld [vmem:[#allocation5 + $0xc0] sm:$0xff]
    %v86 = vld [vmem:[#allocation5 + $0xc8] sm:$0xff]
    %v87 = vld [vmem:[#allocation5 + $0xd0] sm:$0xff]
    %v88 = vld [vmem:[#allocation5 + $0xd8] sm:$0xff]
    %v89 = vld [vmem:[#allocation5 + $0xe0] sm:$0xff]
    %v90 = vld [vmem:[#allocation5 + $0xe8] sm:$0xff]
    %v91 = vld [vmem:[#allocation5 + $0xf0] sm:$0xff]
    %v92 = vld [vmem:[#allocation5 + $0xf8] sm:$0xff]
    %v93 = vld [vmem:[#allocation5 + $0x100] sm:$0xff]
    %v94 = vld [vmem:[#allocation5 + $0x108] sm:$0xff]
    %v95 = vld [vmem:[#allocation5 + $0x110] sm:$0xff]
    %v96 = vld [vmem:[#allocation5 + $0x118] sm:$0xff]
    %v97 = vld [vmem:[#allocation5 + $0x120] sm:$0xff]
    %v98 = vld [vmem:[#allocation5 + $0x128] sm:$0xff]
    %v99 = vld [vmem:[#allocation5 + $0x130] sm:$0xff]
    %v100 = vld [vmem:[#allocation5 + $0x138] sm:$0xff]
    %v101 = vld [vmem:[#allocation5 + $0x140] sm:$0xff]
    %v102 = vld [vmem:[#allocation5 + $0x148] sm:$0xff]
    %v103 = vld [vmem:[#allocation5 + $0x150] sm:$0xff]
    %v104 = vld [vmem:[#allocation5 + $0x158] sm:$0xff]
    %v105 = vld [vmem:[#allocation5 + $0x160] sm:$0xff]
    %v106 = vld [vmem:[#allocation5 + $0x168] sm:$0xff]
    %v107 = vld [vmem:[#allocation5 + $0x170] sm:$0xff]
    %v108 = vld [vmem:[#allocation5 + $0x178] sm:$0xff]
    %109 = vmatprep.subr.mxu0 %v62
    %110 = vmatpush1.msra.mxu0 %v61
    %111 = vmatprep.subr.mxu0 %v65
    %112 = vmatpush1.msra.mxu0 %v64
    %113 = vmatprep.subr.mxu0 %v68
    %114 = vmatpush1.msra.mxu0 %v67
    %115 = vmatprep.subr.mxu0 %v71
    %116 = vmatpush1.msra.mxu0 %v70
    %117 = vmatprep.subr.mxu0 %v74
    %118 = vmatpush1.msra.mxu0 %v73
    %119 = vmatprep.subr.mxu0 %v77
    %120 = vmatpush1.msra.mxu0 %v76
    %121 = vmatprep.subr.mxu0 %v80
    %122 = vmatpush1.msra.mxu0 %v79
    %123 = vmatprep.subr.mxu0 %v83
    %124 = vmatpush1.msra.mxu0 %v82
    %125 = vmatprep.subr.mxu0 %v86
    %126 = vmatpush1.msra.mxu0 %v85
    %127 = vmatprep.subr.mxu0 %v89
    %128 = vmatpush1.msra.mxu0 %v88
    %129 = vmatprep.subr.mxu0 %v92
    %130 = vmatpush1.msra.mxu0 %v91
    %131 = vmatprep.subr.mxu0 %v95
    %132 = vmatpush1.msra.mxu0 %v94
    %133 = vmatprep.subr.mxu0 %v98
    %134 = vmatpush1.msra.mxu0 %v97
    %135 = vmatprep.subr.mxu0 %v101
    %136 = vmatpush1.msra.mxu0 %v100
    %137 = vmatprep.subr.mxu0 %v104
    %138 = vmatpush1.msra.mxu0 %v103
    %139 = vmatprep.subr.mxu0 %v107
    %140 = vmatpush1.msra.mxu0 %v106
    %141 = vmatprep.subr.mxu0 0.0
    %142 = vmatpush1.msra.mxu0 0.0
    %143 = vmatprep.subr.mxu0 0.0
    %144 = vmatpush1.msra.mxu0 0.0
    %145 = vmatprep.subr.mxu0 0.0
    %146 = vmatpush1.msra.mxu0 0.0
    %147 = vmatprep.subr.mxu0 0.0
    %148 = vmatpush1.msra.mxu0 0.0
    %149 = vmatprep.subr.mxu0 0.0
    %150 = vmatpush1.msra.mxu0 0.0
    %151 = vmatprep.subr.mxu0 0.0
    %152 = vmatpush1.msra.mxu0 0.0
    %153 = vmatprep.subr.mxu0 0.0
    %154 = vmatpush1.msra.mxu0 0.0
    %155 = vmatprep.subr.mxu0 0.0
    %156 = vmatpush1.msra.mxu0 0.0
    %157 = vmatprep.subr.mxu0 0.0
    %158 = vmatpush1.msra.mxu0 0.0
    %159 = vmatprep.subr.mxu0 0.0
    %160 = vmatpush1.msra.mxu0 0.0
    %161 = vmatprep.subr.mxu0 0.0
    %162 = vmatpush1.msra.mxu0 0.0
    %163 = vmatprep.subr.mxu0 0.0
    %164 = vmatpush1.msra.mxu0 0.0
    %165 = vmatprep.subr.mxu0 0.0
    %166 = vmatpush1.msra.mxu0 0.0
    %167 = vmatprep.subr.mxu0 0.0
    %168 = vmatpush1.msra.mxu0 0.0
    %169 = vmatprep.subr.mxu0 0.0
    %170 = vmatpush1.msra.mxu0 0.0
    %171 = vmatprep.subr.mxu0 0.0
    %172 = vmatpush1.msra.mxu0 0.0
    %173 = vmatprep.mubr.f32.mxu0 0.0
    %174 = vmatmul.mubr.f32.gmra.mrb[0].mxu0 %v60
    %v175 = vpop.f32.mrb[0].mxu0
    %v176 = vadd.f32 0.0, %v175
    %v177 = vpop.f32.mrb[0].mxu0
    %v178 = vadd.f32 0.0, %v177
    %179 = vdwg.mxu0
    %180 = vmatprep.subr.mxu0 0.0
    %181 = vmatpush1.msra.mxu0 %v63
    %182 = vmatprep.subr.mxu0 0.0
    %183 = vmatpush1.msra.mxu0 %v66
    %184 = vmatprep.subr.mxu0 0.0
    %185 = vmatpush1.msra.mxu0 %v69
    %186 = vmatprep.subr.mxu0 0.0
    %187 = vmatpush1.msra.mxu0 %v72
    %188 = vmatprep.subr.mxu0 0.0
    %189 = vmatpush1.msra.mxu0 %v75
    %190 = vmatprep.subr.mxu0 0.0
    %191 = vmatpush1.msra.mxu0 %v78
    %192 = vmatprep.subr.mxu0 0.0
    %193 = vmatpush1.msra.mxu0 %v81
    %194 = vmatprep.subr.mxu0 0.0
    %195 = vmatpush1.msra.mxu0 %v84
    %196 = vmatprep.subr.mxu0 0.0
    %197 = vmatpush1.msra.mxu0 %v87
    %198 = vmatprep.subr.mxu0 0.0
    %199 = vmatpush1.msra.mxu0 %v90
    %200 = vmatprep.subr.mxu0 0.0
    %201 = vmatpush1.msra.mxu0 %v93
    %202 = vmatprep.subr.mxu0 0.0
    %203 = vmatpush1.msra.mxu0 %v96
    %204 = vmatprep.subr.mxu0 0.0
    %205 = vmatpush1.msra.mxu0 %v99
    %206 = vmatprep.subr.mxu0 0.0
    %207 = vmatpush1.msra.mxu0 %v102
    %208 = vmatprep.subr.mxu0 0.0
    %209 = vmatpush1.msra.mxu0 %v105
    %210 = vmatprep.subr.mxu0 0.0
    %211 = vmatpush1.msra.mxu0 %v108
    %212 = vmatprep.subr.mxu0 0.0
    %213 = vmatpush1.msra.mxu0 0.0
    %214 = vmatprep.subr.mxu0 0.0
    %215 = vmatpush1.msra.mxu0 0.0
    %216 = vmatprep.subr.mxu0 0.0
    %217 = vmatpush1.msra.mxu0 0.0
    %218 = vmatprep.subr.mxu0 0.0
    %219 = vmatpush1.msra.mxu0 0.0
    %220 = vmatprep.subr.mxu0 0.0
    %221 = vmatpush1.msra.mxu0 0.0
    %222 = vmatprep.subr.mxu0 0.0
    %223 = vmatpush1.msra.mxu0 0.0
    %224 = vmatprep.subr.mxu0 0.0
    %225 = vmatpush1.msra.mxu0 0.0
    %226 = vmatprep.subr.mxu0 0.0
    %227 = vmatpush1.msra.mxu0 0.0
    %228 = vmatprep.subr.mxu0 0.0
    %229 = vmatpush1.msra.mxu0 0.0
    %230 = vmatprep.subr.mxu0 0.0
    %231 = vmatpush1.msra.mxu0 0.0
    %232 = vmatprep.subr.mxu0 0.0
    %233 = vmatpush1.msra.mxu0 0.0
    %234 = vmatprep.subr.mxu0 0.0
    %235 = vmatpush1.msra.mxu0 0.0
    %236 = vmatprep.subr.mxu0 0.0
    %237 = vmatpush1.msra.mxu0 0.0
    %238 = vmatprep.subr.mxu0 0.0
    %239 = vmatpush1.msra.mxu0 0.0
    %240 = vmatprep.subr.mxu0 0.0
    %241 = vmatpush1.msra.mxu0 0.0
    %242 = vmatprep.subr.mxu0 0.0
    %243 = vmatpush1.msra.mxu0 0.0
    %244 = vmatprep.mubr.f32.mxu0 0.0
    %245 = vmatmul.mubr.f32.gmra.mrb[0].mxu0 %v60
    %v246 = vpop.f32.mrb[0].mxu0
    %v247 = vadd.f32 0.0, %v246
    %v248 = vpop.f32.mrb[0].mxu0
    %249 = vdwg.mxu0
    %v250 = vmul.f32 %v178, %v247
    %251 = vadd.xlane.f32.xlu0 %v250
    %v252 = vpop.xlane.xlu0 %251
    %v253 = vmul.f32 %v252, %v176
    %v254 = vld [vmem:[#allocation7] sm:$0xff]
    %v255 = vld [vmem:[#allocation7 + $0x8] sm:$0xff]
    %v256 = vld [vmem:[#allocation7 + $0x10] sm:$0xff]
    %v257 = vld [vmem:[#allocation7 + $0x18] sm:$0xff]
    %v258 = vld [vmem:[#allocation7 + $0x20] sm:$0xff]
    %v259 = vld [vmem:[#allocation7 + $0x28] sm:$0xff]
    %v260 = vld [vmem:[#allocation7 + $0x30] sm:$0xff]
    %v261 = vld [vmem:[#allocation7 + $0x38] sm:$0xff]
    %v262 = vld [vmem:[#allocation7 + $0x40] sm:$0xff]
    %v263 = vld [vmem:[#allocation7 + $0x48] sm:$0xff]
    %v264 = vld [vmem:[#allocation7 + $0x50] sm:$0xff]
    %v265 = vld [vmem:[#allocation7 + $0x58] sm:$0xff]
    %v266 = vld [vmem:[#allocation7 + $0x60] sm:$0xff]
    %v267 = vld [vmem:[#allocation7 + $0x68] sm:$0xff]
    %v268 = vld [vmem:[#allocation7 + $0x70] sm:$0xff]
    %v269 = vld [vmem:[#allocation7 + $0x78] sm:$0xff]
    %270 = vmatprep.subr.mxu0 0.0
    %271 = vmatpush1.msra.mxu0 %v254
    %272 = vmatprep.subr.mxu0 0.0
    %273 = vmatpush1.msra.mxu0 %v255
    %274 = vmatprep.subr.mxu0 0.0
    %275 = vmatpush1.msra.mxu0 %v256
    %276 = vmatprep.subr.mxu0 0.0
    %277 = vmatpush1.msra.mxu0 %v257
    %278 = vmatprep.subr.mxu0 0.0
    %279 = vmatpush1.msra.mxu0 %v258
    %280 = vmatprep.subr.mxu0 0.0
    %281 = vmatpush1.msra.mxu0 %v259
    %282 = vmatprep.subr.mxu0 0.0
    %283 = vmatpush1.msra.mxu0 %v260
    %284 = vmatprep.subr.mxu0 0.0
    %285 = vmatpush1.msra.mxu0 %v261
    %286 = vmatprep.subr.mxu0 0.0
    %287 = vmatpush1.msra.mxu0 %v262
    %288 = vmatprep.subr.mxu0 0.0
    %289 = vmatpush1.msra.mxu0 %v263
    %290 = vmatprep.subr.mxu0 0.0
    %291 = vmatpush1.msra.mxu0 %v264
    %292 = vmatprep.subr.mxu0 0.0
    %293 = vmatpush1.msra.mxu0 %v265
    %294 = vmatprep.subr.mxu0 0.0
    %295 = vmatpush1.msra.mxu0 %v266
    %296 = vmatprep.subr.mxu0 0.0
    %297 = vmatpush1.msra.mxu0 %v267
    %298 = vmatprep.subr.mxu0 0.0
    %299 = vmatpush1.msra.mxu0 %v268
    %300 = vmatprep.subr.mxu0 0.0
    %301 = vmatpush1.msra.mxu0 %v269
    %302 = vmatprep.subr.mxu0 0.0
    %303 = vmatpush1.msra.mxu0 0.0
    %304 = vmatprep.subr.mxu0 0.0
    %305 = vmatpush1.msra.mxu0 0.0
    %306 = vmatprep.subr.mxu0 0.0
    %307 = vmatpush1.msra.mxu0 0.0
    %308 = vmatprep.subr.mxu0 0.0
    %309 = vmatpush1.msra.mxu0 0.0
    %310 = vmatprep.subr.mxu0 0.0
    %311 = vmatpush1.msra.mxu0 0.0
    %312 = vmatprep.subr.mxu0 0.0
    %313 = vmatpush1.msra.mxu0 0.0
    %314 = vmatprep.subr.mxu0 0.0
    %315 = vmatpush1.msra.mxu0 0.0
    %316 = vmatprep.subr.mxu0 0.0
    %317 = vmatpush1.msra.mxu0 0.0
    %318 = vmatprep.subr.mxu0 0.0
    %319 = vmatpush1.msra.mxu0 0.0
    %320 = vmatprep.subr.mxu0 0.0
    %321 = vmatpush1.msra.mxu0 0.0
    %322 = vmatprep.subr.mxu0 0.0
    %323 = vmatpush1.msra.mxu0 0.0
    %324 = vmatprep.subr.mxu0 0.0
    %325 = vmatpush1.msra.mxu0 0.0
    %326 = vmatprep.subr.mxu0 0.0
    %327 = vmatpush1.msra.mxu0 0.0
    %328 = vmatprep.subr.mxu0 0.0
    %329 = vmatpush1.msra.mxu0 0.0
    %330 = vmatprep.subr.mxu0 0.0
    %331 = vmatpush1.msra.mxu0 0.0
    %332 = vmatprep.subr.mxu0 0.0
    %333 = vmatpush1.msra.mxu0 0.0
    %334 = vmatprep.mubr.f32.mxu0 0.0
    %335 = vmatmul.mubr.f32.gmra.mrb[0].mxu0 %v253
    %v336 = vpop.f32.mrb[0].mxu0
    %v337 = vadd.f32 0.0, %v336
    %v338 = vpop.f32.mrb[0].mxu0
    %339 = vdwg.mxu0
    %340 = vadd.xlane.f32.xlu0 %v337
    %v341 = vpop.xlane.xlu0 %340
    %v342 = vmul.f32 %v341, 0.0078125
    %v343 = vmul.f32 %v337, %v337
    %344 = vadd.xlane.f32.xlu0 %v343
    %v345 = vpop.xlane.xlu0 %344
    %v346 = vmul.f32 %v345, 0.0078125
    %v347 = vmul.f32 %v342, %v342
    %v348 = vsub.f32 %v346, %v347
    %v349 = vmax.f32 %v348, 0.0
    %v350 = vsub.f32 %v337, %v342
    %v351 = vadd.f32 %v349, 1e-05
    %v352 = vrsqrt.pop %v351
    %v353 = vmul.f32 %v350, %v352
    %v354 = vld [vmem:[%s3] sm:$0x1]
    %v356 = vlaneseq
    %v357 = vshrl.u32 %v356, 7
    %v358 = vsub.s32 0, %v357
    %v359 = vrot.slane %v354, %v358
    %v361 = vmul.f32 %v359, %v353
    %v362 = vld [vmem:[%s4] sm:$0x1]
    %v364 = vlaneseq
    %v365 = vshrl.u32 %v364, 7
    %v366 = vsub.s32 0, %v365
    %v367 = vrot.slane %v362, %v366
    %v369 = vadd.f32 %v361, %v367
    %v370 = vadd.f32 %v369, %v60
    %371 = vst [vmem:[#allocation8] sm:$0xff] %v370
    // Predicated region
    $region34: #{tpu_custom_call.1} parent=1 // pred_check
      _
    $region35: #{tpu_custom_call.1} parent=1 // pred_check_branch
      %373 = sbr.rel (0) target = $region37
    $region36: #{tpu_custom_call.1} parent=1 // pred_region
      %s375 = ssub.s32 128, 128
      %376 = vsyncadd [#allocation4], %s375
      %s378 = sshll.u32 [#allocation8], 4
      %s379 = int_to_ptr.vmem [resolvable:$true] %s378
      %381 = dma.vmem_to_hbm [thread:$0]  %s379, 128, %s5, [#allocation4]
    $region37: #{tpu_custom_call.1} parent=1 // pred_fallthru
      _
    // Predicated region
    $region38: #{tpu_custom_call.1} parent=1 // pred_check
      _
    $region39: #{tpu_custom_call.1} parent=1 // pred_check_branch
      %383 = sbr.rel (0) target = $region41
    $region40: #{tpu_custom_call.1} parent=1 // pred_region
      %384 = dma.done [#allocation4], 128
    $region41: #{tpu_custom_call.1} parent=1 // pred_fallthru
      _
    %385 = vsyncpa [#allocation3], 1
    %386 = vsyncpa [#allocation6], 1
    %387 = vsyncpa [#allocation4], 1

</llo_original>
